<compile_context>
chip_gen: v5e
topology: v5e:2x2
jax: 0.10.0
libtpu: 0.0.40
codegen_flags: <defaults>
</compile_context>

<pallas_src>
import jax
import jax.numpy as jnp
from jax.experimental import pallas as pl
from jax.experimental.pallas import tpu as pltpu

LANE = 128          # TPU lane width (last-axis vreg width)
NEG_BIG = -1.0e30   # finite "-inf": exp(NEG_BIG - m) underflows to exactly 0
MAX_TB = 512        # batch tile cap (safe for v7x 32 MiB scoped VMEM default)


def h2_kernel(x_ref, w_ref, b_ref, o_ref):
    x = x_ref[...]                                   # (TB, D)      f32
    w = w_ref[...]                                   # (D, C_pad)   f32, resident
    b = b_ref[...]                                   # (1, C_pad)   f32, resident

    # Linear layer on the MXU, f32 accumulation. Padded weight columns are 0
    # and padded bias lanes are NEG_BIG, so padded logits are ~-1e30.
    logits = jnp.dot(x, w, preferred_element_type=jnp.float32) + b   # (TB, C_pad)

    # Numerically stable softmax along the class axis (== torch Softmax(dim=1)).
    # Padded lanes contribute exp(~-1e30 - m) == 0 to both max and sum.
    m = jnp.max(logits, axis=-1, keepdims=True)      # (TB, 1)
    e = jnp.exp(logits - m)                          # (TB, C_pad)
    s = jnp.sum(e, axis=-1, keepdims=True)           # (TB, 1), >= 1

    # EUP reciprocal + one Newton-Raphson step (restores ~f32 precision) keeps
    # the divide off the VALU slots.
    inv = pl.reciprocal(s, approx=True)
    inv = inv * (2.0 - s * inv)

    o_ref[...] = (e * inv).astype(o_ref.dtype)


def pack_h2_params(weight, bias):
    """One-time (model-init) packing of PyTorch-layout params.

    weight: (C, D) f32, bias: (C,) f32  ->
      w_packed: (D, C_pad) f32  (transposed, zero-padded classes)
      b_packed: (1, C_pad) f32  (NEG_BIG in padded class lanes)
    """
    C, D = weight.shape
    C_pad = max(LANE, pl.cdiv(C, LANE) * LANE)
    w_packed = jnp.zeros((D, C_pad), jnp.float32).at[:, :C].set(
        weight.T.astype(jnp.float32))
    b_packed = jnp.full((1, C_pad), NEG_BIG, jnp.float32).at[0, :C].set(
        bias.astype(jnp.float32))
    return w_packed, b_packed


def h2_forward(x, w_packed, b_packed, n_class):
    """x: (B, D) f32; packed params from pack_h2_params.
    Returns softmax(x @ W.T + b, axis=1) of shape (B, n_class)."""
    B, D = x.shape
    C_pad = w_packed.shape[1]

    # Batch tiling: single block for small B (block == full dim is always
    # legal); otherwise 512-row tiles with zero-padding of the ragged tail.
    if B <= MAX_TB:
        TB, B_pad = B, B
    else:
        TB = MAX_TB
        B_pad = pl.cdiv(B, TB) * TB
    if B_pad != B:
        x = jnp.pad(x, ((0, B_pad - B), (0, 0)))

    out = pl.pallas_call(
        h2_kernel,
        out_shape=jax.ShapeDtypeStruct((B_pad, C_pad), jnp.float32),
        grid=(B_pad // TB,),
        in_specs=[
            # x: one batch tile per grid step.
            pl.BlockSpec((TB, D), lambda i: (i, 0),
                         memory_space=pltpu.MemorySpace.VMEM),
            # weight / bias: same block every step -> stay VMEM-resident.
            pl.BlockSpec((D, C_pad), lambda i: (0, 0),
                         memory_space=pltpu.MemorySpace.VMEM),
            pl.BlockSpec((1, C_pad), lambda i: (0, 0),
                         memory_space=pltpu.MemorySpace.VMEM),
        ],
        out_specs=pl.BlockSpec((TB, C_pad), lambda i: (i, 0),
                               memory_space=pltpu.MemorySpace.VMEM),
        compiler_params=pltpu.CompilerParams(
            dimension_semantics=("parallel",),
        ),
    )(x, w_packed, b_packed)

    # Strip batch padding and the lane padding of the class axis.
    return out[:B, :n_class]


if __name__ == "__main__":
    in_dim = 128
    n_class = 31
    batch = 8

    key = jax.random.PRNGKey(0)
    kx, kw, kb = jax.random.split(key, 3)

    # Deterministic synthetic parameters (PyTorch Linear shapes: W (C, D), b (C,)).
    bound = 1.0 / jnp.sqrt(in_dim)
    weight = jax.random.uniform(kw, (n_class, in_dim), jnp.float32, -bound, bound)
    bias = jax.random.uniform(kb, (n_class,), jnp.float32, -bound, bound)
    x = jax.random.normal(kx, (batch, in_dim), jnp.float32)

    # Init-time packing (done once, outside the forward path).
    w_packed, b_packed = jax.block_until_ready(pack_h2_params(weight, bias))

    out = jax.block_until_ready(h2_forward(x, w_packed, b_packed, n_class))

    # Reference check in plain JAX.
    ref = jax.nn.softmax(x @ weight.T + bias, axis=1)
    assert out.shape == (batch, n_class)
    assert jnp.allclose(out, ref, atol=1e-5, rtol=1e-5), float(
        jnp.max(jnp.abs(out - ref)))
    assert jnp.allclose(jnp.sum(out, axis=1), 1.0, atol=1e-5)

    print("KERNEL_OK")
</pallas_src>

<mosaic_0001>
module attributes {stable_mosaic.version = 11 : i64} {
  func.func @h2_kernel(%arg0: i32, %arg1: memref<8x128xf32, #tpu.memory_space<vmem>>, %arg2: memref<128x128xf32, #tpu.memory_space<vmem>>, %arg3: memref<1x128xf32, #tpu.memory_space<vmem>>, %arg4: memref<8x128xf32, #tpu.memory_space<vmem>>) attributes {dimension_semantics = [#tpu.dimension_semantics<parallel>], iteration_bounds = array<i64: 1>, scalar_prefetch = 0 : i64, scratch_operands = 0 : i64, tpu.core_type = #tpu.core_type<tc>, window_params = [{transform_indices = @transform_0, window_bounds = array<i64: 8, 128>}, {pipeline_mode = #tpu.pipeline_mode<synchronous>, transform_indices = @transform_1, window_bounds = array<i64: 128, 128>}, {pipeline_mode = #tpu.pipeline_mode<synchronous>, transform_indices = @transform_2, window_bounds = array<i64: 1, 128>}, {transform_indices = @transform_3, window_bounds = array<i64: 8, 128>}]} {
    %c0 = arith.constant 0 : index
    %c0_0 = arith.constant 0 : index
    %0 = vector.load %arg1[%c0, %c0_0] : memref<8x128xf32, #tpu.memory_space<vmem>>, vector<8x128xf32>
    %c0_1 = arith.constant 0 : index
    %c0_2 = arith.constant 0 : index
    %1 = vector.load %arg2[%c0_1, %c0_2] : memref<128x128xf32, #tpu.memory_space<vmem>>, vector<128x128xf32>
    %c0_3 = arith.constant 0 : index
    %c0_4 = arith.constant 0 : index
    %2 = vector.load %arg3[%c0_3, %c0_4] : memref<1x128xf32, #tpu.memory_space<vmem>>, vector<1x128xf32>
    %cst = arith.constant dense<0.000000e+00> : vector<8x128xf32>
    %3 = tpu.matmul %0, %1, %cst {dimension_numbers = #tpu.dot_dimension_numbers<[1], [0], [0], [1], [0, 0, 1, 1], [], []>} : vector<8x128xf32>, vector<128x128xf32>, vector<8x128xf32> -> vector<8x128xf32>
    %4 = vector.broadcast %2 : vector<1x128xf32> to vector<8x128xf32>
    %5 = arith.addf %3, %4 : vector<8x128xf32>
    %cst_5 = arith.constant dense<0xFF800000> : vector<8xf32>
    %6 = vector.multi_reduction <maximumf>, %5, %cst_5 [1] : vector<8x128xf32> to vector<8xf32>
    %7 = vector.shape_cast %6 : vector<8xf32> to vector<8x1xf32>
    %8 = vector.broadcast %7 : vector<8x1xf32> to vector<8x128xf32>
    %9 = arith.subf %5, %8 : vector<8x128xf32>
    %10 = math.exp %9 : vector<8x128xf32>
    %cst_6 = arith.constant dense<0.000000e+00> : vector<8xf32>
    %11 = vector.multi_reduction <add>, %10, %cst_6 [1] : vector<8x128xf32> to vector<8xf32>
    %12 = vector.shape_cast %11 : vector<8xf32> to vector<8x1xf32>
    %13 = tpu.reciprocal %12 {approx = true} : vector<8x1xf32> -> vector<8x1xf32>
    %14 = arith.mulf %12, %13 : vector<8x1xf32>
    %cst_7 = arith.constant 2.000000e+00 : f32
    %15 = vector.broadcast %cst_7 : f32 to vector<8x1xf32>
    %16 = arith.subf %15, %14 : vector<8x1xf32>
    %17 = arith.mulf %13, %16 : vector<8x1xf32>
    %18 = vector.broadcast %17 : vector<8x1xf32> to vector<8x128xf32>
    %19 = arith.mulf %10, %18 : vector<8x128xf32>
    %c0_8 = arith.constant 0 : index
    %c0_9 = arith.constant 0 : index
    %20 = vector.load %arg4[%c0_8, %c0_9] : memref<8x128xf32, #tpu.memory_space<vmem>>, vector<8x128xf32>
    tpu.vector_store %arg4[%c0_8, %c0_9], %19 {strides = array<i32>} : memref<8x128xf32, #tpu.memory_space<vmem>>, vector<8x128xf32>,
    return
  }
  func.func @transform_0(%arg0: i32) -> (i32, i32) {
    %c0_i32 = arith.constant 0 : i32
    %c0_i32_0 = arith.constant 0 : i32
    return %arg0, %c0_i32 : i32, i32
  }
  func.func @transform_1(%arg0: i32) -> (i32, i32) {
    %c0_i32 = arith.constant 0 : i32
    %c0_i32_0 = arith.constant 0 : i32
    %c0_i32_1 = arith.constant 0 : i32
    return %c0_i32, %c0_i32_0 : i32, i32
  }
  func.func @transform_2(%arg0: i32) -> (i32, i32) {
    %c0_i32 = arith.constant 0 : i32
    %c0_i32_0 = arith.constant 0 : i32
    %c0_i32_1 = arith.constant 0 : i32
    return %c0_i32, %c0_i32_0 : i32, i32
  }
  func.func @transform_3(%arg0: i32) -> (i32, i32) {
    %c0_i32 = arith.constant 0 : i32
    %c0_i32_0 = arith.constant 0 : i32
    return %arg0, %c0_i32 : i32, i32
  }
}

</mosaic_0001>

<llo_original>
// kernel: tpu_custom_call.1
$region0: #{tpu_custom_call.1}
  #allocation0 [shape = 'u32[]', space=smem, size = 0x4, offset = 0x4, fixed_abs, tag = 'smem constant byte address 0x4 - core index']
  #allocation1 [shape = 'u32[72,128]{1,0:T(1,128)}', space=vmem, size = 0x9000, scoped, tag = 'internal scratch']
  %s0 = inlined_call_operand.hbm [shape: f32[8,128], index: 0, kind: input, shape index: {}]
  %s1 = inlined_call_operand.hbm [shape: f32[128,128], index: 1, kind: input, shape index: {}]
  %s2 = inlined_call_operand.vmem [shape: f32[1,128], index: 2, kind: input, shape index: {}]
  %s3 = inlined_call_operand.hbm [shape: f32[8,128], index: 3, kind: output, shape index: {}]
  %s4 = sld [smem:[#allocation0]]
  $region30: #{tpu_custom_call.1} parent=0
    _
  %s6 = ssub.s32 1, %s4
  %s7 = scalar_select 0, %s6, %s4
  $region1: #{tpu_custom_call.1} parent=0
    #allocation2 [shape = 'u8[4096]{0}', space=vmem, size = 0x1000, scoped, tag = 'input window, operand 0, single buffered']
    #allocation3 [shape = 's32[1]{0}', space=sflag, size = 0x4, scoped, tag = 'scoped memory for tpu_custom_call.1']
    #allocation4 [shape = 's32[1]{0}', space=sflag, size = 0x4, scoped, tag = 'scoped memory for tpu_custom_call.1']
    #allocation5 [shape = 'u8[65536]{0}', space=vmem, size = 0x10000, scoped, tag = 'input window, operand 1, single buffered']
    #allocation6 [shape = 's32[1]{0}', space=sflag, size = 0x4, scoped, tag = 'scoped memory for tpu_custom_call.1']
    #allocation7 [shape = 'u8[4096]{0}', space=vmem, size = 0x1000, scoped, tag = 'output window, operand 0, single buffered']
    %8 = vsyncpa [#allocation3], 0
    %9 = vsyncpa [#allocation6], 0
    %10 = vsyncpa [#allocation4], 0
    // Predicated region
    $region2: #{tpu_custom_call.1} parent=1 // pred_check
      _
    $region3: #{tpu_custom_call.1} parent=1 // pred_check_branch
      %12 = sbr.rel (0) target = $region5
    $region4: #{tpu_custom_call.1} parent=1 // pred_region
      %14 = vsyncadd [#allocation3], 0
      %s16 = sshll.u32 %s0, 4
      %s17 = int_to_ptr.hbm [resolvable:$true] %s16
      %s18 = sshll.u32 [#allocation2], 4
      %s19 = int_to_ptr.vmem [resolvable:$true] %s18
      %21 = dma.hbm_to_vmem [thread:$0]  %s17, 128, %s19, [#allocation3]
    $region5: #{tpu_custom_call.1} parent=1 // pred_fallthru
      _
    // Predicated region
    $region6: #{tpu_custom_call.1} parent=1 // pred_check
      _
    $region7: #{tpu_custom_call.1} parent=1 // pred_check_branch
      %23 = sbr.rel (0) target = $region9
    $region8: #{tpu_custom_call.1} parent=1 // pred_region
      %25 = vsyncadd [#allocation6], 0
      %s26 = sshll.u32 %s1, 4
      %s27 = int_to_ptr.hbm [resolvable:$true] %s26
      %s28 = sshll.u32 [#allocation5], 4
      %s29 = int_to_ptr.vmem [resolvable:$true] %s28
      %34 = dma.hbm_to_vmem [thread:$0]  %s27, 2048, %s29, [#allocation6], 128, 128, 8
    $region9: #{tpu_custom_call.1} parent=1 // pred_fallthru
      _
    // Predicated region
    $region10: #{tpu_custom_call.1} parent=1 // pred_check
      _
    $region11: #{tpu_custom_call.1} parent=1 // pred_check_branch
      %36 = sbr.rel (0) target = $region13
    $region12: #{tpu_custom_call.1} parent=1 // pred_region
      _
    $region13: #{tpu_custom_call.1} parent=1 // pred_fallthru
      _
    // Predicated region
    $region14: #{tpu_custom_call.1} parent=1 // pred_check
      _
    $region15: #{tpu_custom_call.1} parent=1 // pred_check_branch
      %38 = sbr.rel (0) target = $region17
    $region16: #{tpu_custom_call.1} parent=1 // pred_region
      %40 = dma.done [#allocation3], 128
    $region17: #{tpu_custom_call.1} parent=1 // pred_fallthru
      _
    // Predicated region
    $region18: #{tpu_custom_call.1} parent=1 // pred_check
      _
    $region19: #{tpu_custom_call.1} parent=1 // pred_check_branch
      %42 = sbr.rel (0) target = $region21
    $region20: #{tpu_custom_call.1} parent=1 // pred_region
      %44 = dma.done [#allocation6], 2048
    $region21: #{tpu_custom_call.1} parent=1 // pred_fallthru
      _
    %v45 = vld [vmem:[#allocation2] sm:$0xff]
    %v46 = vld [vmem:[#allocation5] sm:$0xff]
    %v47 = vld [vmem:[#allocation5 + $0x8] sm:$0xff]
    %v48 = vld [vmem:[#allocation5 + $0x10] sm:$0xff]
    %v49 = vld [vmem:[#allocation5 + $0x18] sm:$0xff]
    %v50 = vld [vmem:[#allocation5 + $0x20] sm:$0xff]
    %v51 = vld [vmem:[#allocation5 + $0x28] sm:$0xff]
    %v52 = vld [vmem:[#allocation5 + $0x30] sm:$0xff]
    %v53 = vld [vmem:[#allocation5 + $0x38] sm:$0xff]
    %v54 = vld [vmem:[#allocation5 + $0x40] sm:$0xff]
    %v55 = vld [vmem:[#allocation5 + $0x48] sm:$0xff]
    %v56 = vld [vmem:[#allocation5 + $0x50] sm:$0xff]
    %v57 = vld [vmem:[#allocation5 + $0x58] sm:$0xff]
    %v58 = vld [vmem:[#allocation5 + $0x60] sm:$0xff]
    %v59 = vld [vmem:[#allocation5 + $0x68] sm:$0xff]
    %v60 = vld [vmem:[#allocation5 + $0x70] sm:$0xff]
    %v61 = vld [vmem:[#allocation5 + $0x78] sm:$0xff]
    %v62 = vld [vmem:[%s2] sm:$0x1]
    %v64 = vperm.slane %v62, 0
    %66 = vmatpush.msra.mxu0 %v61
    %67 = vmatpush.msra.mxu0 %v60
    %68 = vmatpush.msra.mxu0 %v59
    %69 = vmatpush.msra.mxu0 %v58
    %70 = vmatpush.msra.mxu0 %v57
    %71 = vmatpush.msra.mxu0 %v56
    %72 = vmatpush.msra.mxu0 %v55
    %73 = vmatpush.msra.mxu0 %v54
    %74 = vmatpush.msra.mxu0 %v53
    %75 = vmatpush.msra.mxu0 %v52
    %76 = vmatpush.msra.mxu0 %v51
    %77 = vmatpush.msra.mxu0 %v50
    %78 = vmatpush.msra.mxu0 %v49
    %79 = vmatpush.msra.mxu0 %v48
    %80 = vmatpush.msra.mxu0 %v47
    %81 = vmatpush.msra.mxu0 %v46
    %82 = vmatmul.f32.gmra.mxu0 %v45
    %v83 = vpop.f32.mrf.mxu0
    %v84 = vadd.f32 %v64, %v83
    %85 = vdwg.mxu0
    %86 = vmax.xlane.f32.xlu0 %v84
    %v87 = vpop.xlane.xlu0 %86
    %v88 = vsub.f32 %v84, %v87
    %v89 = vmul.f32 %v88, 1.442695
    %v90 = vpow.pop %v89
    %91 = vadd.xlane.f32.xlu0 %v90
    %v92 = vpop.xlane.xlu0 %91
    %v93 = vrcp.pop %v92
    %v94 = vmul.f32 %v92, %v93
    %v95 = vsub.f32 2.0, %v94
    %v96 = vmul.f32 %v93, %v95
    %v97 = vmul.f32 %v90, %v96
    %98 = vst [vmem:[#allocation7] sm:$0xff] %v97
    // Predicated region
    $region22: #{tpu_custom_call.1} parent=1 // pred_check
      _
    $region23: #{tpu_custom_call.1} parent=1 // pred_check_branch
      %100 = sbr.rel (0) target = $region25
    $region24: #{tpu_custom_call.1} parent=1 // pred_region
      %102 = vsyncadd [#allocation4], 0
      %s104 = sshll.u32 [#allocation7], 4
      %s105 = int_to_ptr.vmem [resolvable:$true] %s104
      %s106 = sshll.u32 %s3, 4
      %s107 = int_to_ptr.hbm [resolvable:$true] %s106
      %109 = dma.vmem_to_hbm [thread:$0]  %s105, 128, %s107, [#allocation4]
    $region25: #{tpu_custom_call.1} parent=1 // pred_fallthru
      _
    // Predicated region
    $region26: #{tpu_custom_call.1} parent=1 // pred_check
      _
    $region27: #{tpu_custom_call.1} parent=1 // pred_check_branch
      %111 = sbr.rel (0) target = $region29
    $region28: #{tpu_custom_call.1} parent=1 // pred_region
      %113 = dma.done [#allocation4], 128
    $region29: #{tpu_custom_call.1} parent=1 // pred_fallthru
      _
    %114 = vsyncpa [#allocation3], 1
    %115 = vsyncpa [#allocation6], 1
    %116 = vsyncpa [#allocation4], 1

</llo_original>
